<compile_context>
chip_gen: v7x
topology: tpu7x:2x2x1
jax: 0.10.0
libtpu: 0.0.40
codegen_flags: <defaults>
</compile_context>

<pallas_src>
import jax
import jax.numpy as jnp
from jax.experimental import pallas as pl
from jax.experimental.pallas import tpu as pltpu


# ---------------------------------------------------------------------------
# Per-chip VMEM budgeting.
# ---------------------------------------------------------------------------
def _vmem_limit_bytes():
    """~75% of physical VMEM (v7x: 48 MiB, v5e/v6e: 96 MiB), capped at 112 MiB."""
    try:
        cap = int(pltpu.get_tpu_info().vmem_capacity_bytes)
    except Exception:
        cap = 64 * 1024 * 1024          # v7x-safe fallback
    return int(min(cap * 3 // 4, 112 * 1024 * 1024))


def _choose_block_rows(seq_len, vocab, hp, budget_bytes, max_rows=256):
    """Largest pooled-row count per grid step that fits the VMEM budget."""
    per_row = 4 * (2 * seq_len          # ids block (int32), double-buffered
                   + 2 * seq_len        # mask block, double-buffered
                   + 2 * hp             # out block, double-buffered
                   + seq_len * vocab    # one-hot intermediate
                   + 4 * hp)            # pooled / projected temporaries
    fixed = 4 * (vocab * hp + hp * hp + hp)   # resident table + W + bias
    avail = max(budget_bytes - fixed, 8 * per_row)
    return int(max(8, min(max_rows, avail // per_row)))


def _block_and_pad(n_rows, rows_budget):
    """(block, padded_rows) for a flat row axis; block is 8-aligned or full."""
    if rows_budget >= n_rows:
        return n_rows, n_rows
    blk = max(8, (rows_budget // 8) * 8)
    n_pad = -(-n_rows // blk) * blk
    return blk, n_pad


def _block_and_pad_batch(b, n_c, rows_budget):
    """(block_b, padded_b) so block_b*n_c pooled rows fit the budget."""
    blk_b = max(1, rows_budget // n_c)
    if blk_b >= b:
        return b, b
    blk_b = max(8, (blk_b // 8) * 8)
    b_pad = -(-b // blk_b) * blk_b
    return blk_b, b_pad


def _pad_rows(x, n_pad):
    n = x.shape[0]
    if n == n_pad:
        return x
    return jnp.pad(x, [(0, n_pad - n)] + [(0, 0)] * (x.ndim - 1))


# ---------------------------------------------------------------------------
# Shared pooler math (traced into both kernels).
#   embedding "gather" as one-hot counts @ table  ->  masked mean  ->  dense+tanh
# ---------------------------------------------------------------------------
def _pool_rows(ids, mask, table, w, bias):
    rows, seq_len = ids.shape
    vocab = table.shape[0]
    # counts[r, v] = sum_t mask[r, t] * [ids[r, t] == v]
    vocab_iota = jax.lax.broadcasted_iota(jnp.int32, (rows, seq_len, vocab), 2)
    onehot = (ids[:, :, None] == vocab_iota).astype(jnp.float32)
    counts = jnp.sum(onehot * mask[:, :, None], axis=1)               # (R, V)
    # Fused gather + masked sum: one MXU matmul against the VMEM-resident table.
    pooled_sum = jnp.dot(counts, table, preferred_element_type=jnp.float32)
    denom = jnp.maximum(jnp.sum(mask, axis=1, keepdims=True), 1.0)
    pooled = pooled_sum / denom                                        # exact divide
    proj = jnp.dot(pooled, w, preferred_element_type=jnp.float32)      # (R, HP)
    return jnp.tanh(proj + bias)


# ---------------------------------------------------------------------------
# Kernel 1: generic encoder pooler (used for the question encoder).
# ---------------------------------------------------------------------------
def _pooler_kernel(ids_ref, mask_ref, table_ref, w_ref, b_ref, out_ref):
    out_ref[...] = _pool_rows(ids_ref[...], mask_ref[...], table_ref[...],
                              w_ref[...], b_ref[...])


def encoder_pooler(token_ids, token_mask, enc_params):
    """Synthetic DPR encoder 'pooler_output' for a (N, L) batch of sequences."""
    n_rows, seq_len = token_ids.shape
    table, w, bias = enc_params["emb"], enc_params["w"], enc_params["b"]
    vocab, hp = table.shape

    limit = _vmem_limit_bytes()
    rows_budget = _choose_block_rows(seq_len, vocab, hp, (limit * 4) // 5)
    block_n, n_pad = _block_and_pad(n_rows, rows_budget)

    ids = _pad_rows(token_ids.astype(jnp.int32), n_pad)
    mask = _pad_rows(token_mask.astype(jnp.float32), n_pad)

    out = pl.pallas_call(
        _pooler_kernel,
        out_shape=jax.ShapeDtypeStruct((n_pad, hp), jnp.float32),
        grid_spec=pltpu.PrefetchScalarGridSpec(
            num_scalar_prefetch=0,
            grid=(n_pad // block_n,),
            in_specs=[
                pl.BlockSpec((block_n, seq_len), lambda i: (i, 0)),   # ids
                pl.BlockSpec((block_n, seq_len), lambda i: (i, 0)),   # mask
                pl.BlockSpec((vocab, hp), lambda i: (0, 0)),          # table (resident)
                pl.BlockSpec((hp, hp), lambda i: (0, 0)),             # W     (resident)
                pl.BlockSpec((1, hp), lambda i: (0, 0)),              # bias  (resident)
            ],
            out_specs=pl.BlockSpec((block_n, hp), lambda i: (i, 0)),
        ),
        compiler_params=pltpu.CompilerParams(
            dimension_semantics=("parallel",),
            vmem_limit_bytes=limit,
        ),
    )(ids, mask, table, w, bias)
    return out[:n_rows]


# ---------------------------------------------------------------------------
# Kernel 2: fused ctx pooler + candidate scoring.
#   Pools block_b*n_c candidate rows and immediately scores them against the
#   corresponding q rows -> (block_b, n_c) scores.  ctx never touches HBM.
# ---------------------------------------------------------------------------
def _ctx_score_kernel(ids_ref, mask_ref, q_ref, table_ref, w_ref, b_ref,
                      score_ref):
    block_b, n_c, seq_len = ids_ref.shape
    ids = ids_ref[...].reshape(block_b * n_c, seq_len)
    mask = mask_ref[...].reshape(block_b * n_c, seq_len)
    pooled = _pool_rows(ids, mask, table_ref[...], w_ref[...], b_ref[...])
    hp = pooled.shape[-1]
    ctx = pooled.reshape(block_b, n_c, hp)
    q = q_ref[...]                                         # (block_b, HP)
    # torch.bmm(ctx, q.unsqueeze(-1)).squeeze(-1): VPU broadcast-mul + lane reduce.
    score_ref[...] = jnp.sum(ctx * q[:, None, :], axis=-1)


def ctx_pool_and_score(cand_ids, cand_masks, q, enc_params):
    b, n_c, seq_len = cand_ids.shape
    table, w, bias = enc_params["emb"], enc_params["w"], enc_params["b"]
    vocab, hp = table.shape

    limit = _vmem_limit_bytes()
    rows_budget = _choose_block_rows(seq_len, vocab, hp, (limit * 4) // 5)
    block_b, b_pad = _block_and_pad_batch(b, n_c, rows_budget)

    ids = _pad_rows(cand_ids.astype(jnp.int32), b_pad)
    mask = _pad_rows(cand_masks.astype(jnp.float32), b_pad)
    q_pad = _pad_rows(q, b_pad)

    score = pl.pallas_call(
        _ctx_score_kernel,
        out_shape=jax.ShapeDtypeStruct((b_pad, n_c), jnp.float32),
        grid_spec=pltpu.PrefetchScalarGridSpec(
            num_scalar_prefetch=0,
            grid=(b_pad // block_b,),
            in_specs=[
                pl.BlockSpec((block_b, n_c, seq_len), lambda i: (i, 0, 0)),  # cand ids
                pl.BlockSpec((block_b, n_c, seq_len), lambda i: (i, 0, 0)),  # cand mask
                pl.BlockSpec((block_b, hp), lambda i: (i, 0)),               # q rows
                pl.BlockSpec((vocab, hp), lambda i: (0, 0)),                 # table
                pl.BlockSpec((hp, hp), lambda i: (0, 0)),                    # W
                pl.BlockSpec((1, hp), lambda i: (0, 0)),                     # bias
            ],
            out_specs=pl.BlockSpec((block_b, n_c), lambda i: (i, 0)),
        ),
        compiler_params=pltpu.CompilerParams(
            dimension_semantics=("parallel",),
            vmem_limit_bytes=limit,
        ),
    )(ids, mask, q_pad, table, w, bias)
    return score[:b]


# ---------------------------------------------------------------------------
# Kernel 3: softmax cross-entropy loss over the (b, n_c) scores.
# ---------------------------------------------------------------------------
def _loss_kernel(score_ref, labels_ref, loss_ref):
    score = score_ref[...]                                 # (b, n_c) f32
    b, n_c = score.shape
    m = jnp.max(score, axis=1, keepdims=True)
    lse = m + jnp.log(jnp.sum(jnp.exp(score - m), axis=1, keepdims=True))
    col = jax.lax.broadcasted_iota(jnp.int32, (b, n_c), 1)
    onehot = (col == labels_ref[...]).astype(jnp.float32)  # labels: (b, 1) int32
    picked = jnp.sum(score * onehot, axis=1, keepdims=True)
    loss_ref[0, 0] = jnp.sum(lse - picked) / b


def run_loss(score, labels):
    b, n_c = score.shape
    loss = pl.pallas_call(
        _loss_kernel,
        out_shape=jax.ShapeDtypeStruct((1, 1), jnp.float32),
        in_specs=[
            pl.BlockSpec(memory_space=pltpu.MemorySpace.VMEM),   # score
            pl.BlockSpec(memory_space=pltpu.MemorySpace.VMEM),   # labels (b, 1)
        ],
        out_specs=pl.BlockSpec(memory_space=pltpu.MemorySpace.SMEM),
        compiler_params=pltpu.CompilerParams(vmem_limit_bytes=_vmem_limit_bytes()),
    )(score, labels.astype(jnp.int32).reshape(b, 1))
    return loss[0, 0]


# ---------------------------------------------------------------------------
# Parameters (hidden padded to a lane/MXU-aligned width; padding lanes are
# zero so scores / loss are identical to the unpadded math).  All f32.
# ---------------------------------------------------------------------------
def _encoder_params(key, vocab, hidden, hidden_pad):
    k_e, k_w = jax.random.split(key)
    emb = jnp.zeros((vocab, hidden_pad), jnp.float32).at[:, :hidden].set(
        0.02 * jax.random.normal(k_e, (vocab, hidden), jnp.float32))
    w = jnp.zeros((hidden_pad, hidden_pad), jnp.float32).at[:hidden, :hidden].set(
        0.02 * jax.random.normal(k_w, (hidden, hidden), jnp.float32))
    return {"emb": emb, "w": w, "b": jnp.zeros((1, hidden_pad), jnp.float32)}


def init_params(key, vocab_size, hidden):
    hidden_pad = max(128, ((hidden + 127) // 128) * 128)
    k_q, k_c = jax.random.split(key)
    return {"q": _encoder_params(k_q, vocab_size, hidden, hidden_pad),
            "ctx": _encoder_params(k_c, vocab_size, hidden, hidden_pad)}


# ---------------------------------------------------------------------------
# Forward (mirrors DPRForSelectionFromCandidates.forward).
# ---------------------------------------------------------------------------
def dpr_selection_forward(params, input_ids, input_masks, cand_ids, cand_masks,
                          labels=None):
    q = encoder_pooler(input_ids, input_masks, params["q"])              # (b, HP)
    score = ctx_pool_and_score(cand_ids, cand_masks, q, params["ctx"])   # (b, n_c)
    if labels is None:
        return (score,)
    loss = run_loss(score, labels)
    return (loss, score)


# ---------------------------------------------------------------------------
# Pure-JAX reference (same synthetic encoder math) for a correctness check.
# ---------------------------------------------------------------------------
def _reference_forward(params, input_ids, input_masks, cand_ids, cand_masks,
                       labels):
    def pool(ids, mask, p):
        emb = p["emb"][ids]                                   # (N, L, HP) f32
        mask = mask.astype(jnp.float32)
        s = jnp.sum(emb * mask[:, :, None], axis=1)
        d = jnp.maximum(jnp.sum(mask, axis=1, keepdims=True), 1.0)
        return jnp.tanh((s / d) @ p["w"] + p["b"])

    b, n_c, l = cand_ids.shape
    q = pool(input_ids, input_masks, params["q"])
    ctx = pool(cand_ids.reshape(b * n_c, l), cand_masks.reshape(b * n_c, l),
               params["ctx"]).reshape(b, n_c, -1)
    score = jnp.einsum("bch,bh->bc", ctx, q)
    m = jnp.max(score, axis=1, keepdims=True)
    lse = m[:, 0] + jnp.log(jnp.sum(jnp.exp(score - m), axis=1))
    picked = jnp.take_along_axis(score, labels[:, None], axis=1)[:, 0]
    return jnp.mean(lse - picked), score


if __name__ == "__main__":
    # Small shapes consistent with the forward: b=2, n_c=8, l=8, hidden=32.
    B, N_C, L, H, VOCAB = 2, 8, 8, 32, 64

    key = jax.random.PRNGKey(0)
    k_par, k_qid, k_cid, k_lbl = jax.random.split(key, 4)

    params = init_params(k_par, VOCAB, H)

    input_ids = jax.random.randint(k_qid, (B, L), 0, VOCAB, dtype=jnp.int32)
    input_masks = (jax.lax.broadcasted_iota(jnp.int32, (B, L), 1)
                   < 7).astype(jnp.float32)
    cand_ids = jax.random.randint(k_cid, (B, N_C, L), 0, VOCAB, dtype=jnp.int32)
    cand_masks = (jax.lax.broadcasted_iota(jnp.int32, (B, N_C, L), 2)
                  < 6).astype(jnp.float32)
    labels = jax.random.randint(k_lbl, (B,), 0, N_C, dtype=jnp.int32)

    loss, score = dpr_selection_forward(params, input_ids, input_masks,
                                        cand_ids, cand_masks, labels)
    (score_only,) = dpr_selection_forward(params, input_ids, input_masks,
                                          cand_ids, cand_masks)
    jax.block_until_ready((loss, score, score_only))

    ref_loss, ref_score = _reference_forward(params, input_ids, input_masks,
                                             cand_ids, cand_masks, labels)
    assert score.shape == (B, N_C) and loss.shape == ()
    assert bool(jnp.allclose(score, ref_score, atol=1e-4))
    assert bool(jnp.allclose(score_only, ref_score, atol=1e-4))
    assert bool(jnp.allclose(loss, ref_loss, atol=1e-3))
    print("KERNEL_OK")
</pallas_src>

<mosaic_0001>
module attributes {stable_mosaic.version = 11 : i64} {
  func.func @_pooler_kernel(%arg0: i32, %arg1: memref<2x8xi32, #tpu.memory_space<vmem>>, %arg2: memref<2x8xf32, #tpu.memory_space<vmem>>, %arg3: memref<64x128xf32, #tpu.memory_space<vmem>>, %arg4: memref<128x128xf32, #tpu.memory_space<vmem>>, %arg5: memref<1x128xf32, #tpu.memory_space<vmem>>, %arg6: memref<2x128xf32, #tpu.memory_space<vmem>>) attributes {dimension_semantics = [#tpu.dimension_semantics<parallel>], iteration_bounds = array<i64: 1>, scalar_prefetch = 0 : i64, scratch_operands = 0 : i64, tpu.core_type = #tpu.core_type<tc>, window_params = [{transform_indices = @transform_0, window_bounds = array<i64: 2, 8>}, {transform_indices = @transform_1, window_bounds = array<i64: 2, 8>}, {pipeline_mode = #tpu.pipeline_mode<synchronous>, transform_indices = @transform_2, window_bounds = array<i64: 64, 128>}, {pipeline_mode = #tpu.pipeline_mode<synchronous>, transform_indices = @transform_3, window_bounds = array<i64: 128, 128>}, {pipeline_mode = #tpu.pipeline_mode<synchronous>, transform_indices = @transform_4, window_bounds = array<i64: 1, 128>}, {transform_indices = @transform_5, window_bounds = array<i64: 2, 128>}]} {
    %c0 = arith.constant 0 : index
    %c0_0 = arith.constant 0 : index
    %0 = vector.load %arg1[%c0, %c0_0] : memref<2x8xi32, #tpu.memory_space<vmem>>, vector<2x8xi32>
    %c0_1 = arith.constant 0 : index
    %c0_2 = arith.constant 0 : index
    %1 = vector.load %arg2[%c0_1, %c0_2] : memref<2x8xf32, #tpu.memory_space<vmem>>, vector<2x8xf32>
    %c0_3 = arith.constant 0 : index
    %c0_4 = arith.constant 0 : index
    %2 = vector.load %arg3[%c0_3, %c0_4] : memref<64x128xf32, #tpu.memory_space<vmem>>, vector<64x128xf32>
    %c0_5 = arith.constant 0 : index
    %c0_6 = arith.constant 0 : index
    %3 = vector.load %arg4[%c0_5, %c0_6] : memref<128x128xf32, #tpu.memory_space<vmem>>, vector<128x128xf32>
    %c0_7 = arith.constant 0 : index
    %c0_8 = arith.constant 0 : index
    %4 = vector.load %arg5[%c0_7, %c0_8] : memref<1x128xf32, #tpu.memory_space<vmem>>, vector<1x128xf32>
    %5 = tpu.iota {dimensions = array<i32: 2>} : vector<2x8x64xi32>
    %6 = vector.shape_cast %0 : vector<2x8xi32> to vector<2x8x1xi32>
    %7 = vector.broadcast %6 : vector<2x8x1xi32> to vector<2x8x64xi32>
    %8 = arith.cmpi eq, %7, %5 : vector<2x8x64xi32>
    %9 = arith.extui %8 : vector<2x8x64xi1> to vector<2x8x64xi32>
    %10 = arith.sitofp %9 : vector<2x8x64xi32> to vector<2x8x64xf32>
    %11 = vector.shape_cast %1 : vector<2x8xf32> to vector<2x8x1xf32>
    %12 = vector.broadcast %11 : vector<2x8x1xf32> to vector<2x8x64xf32>
    %13 = arith.mulf %10, %12 : vector<2x8x64xf32>
    %cst = arith.constant dense<0.000000e+00> : vector<2x64xf32>
    %14 = vector.multi_reduction <add>, %13, %cst [1] : vector<2x8x64xf32> to vector<2x64xf32>
    %cst_9 = arith.constant dense<0.000000e+00> : vector<2x128xf32>
    %15 = tpu.matmul %14, %2, %cst_9 {dimension_numbers = #tpu.dot_dimension_numbers<[1], [0], [0], [1], [0, 0, 1, 1], [], []>} : vector<2x64xf32>, vector<64x128xf32>, vector<2x128xf32> -> vector<2x128xf32>
    %cst_10 = arith.constant dense<0.000000e+00> : vector<2xf32>
    %16 = vector.multi_reduction <add>, %1, %cst_10 [1] : vector<2x8xf32> to vector<2xf32>
    %17 = vector.shape_cast %16 : vector<2xf32> to vector<2x1xf32>
    %cst_11 = arith.constant 1.000000e+00 : f32
    %18 = vector.broadcast %cst_11 : f32 to vector<2x1xf32>
    %19 = arith.maximumf %17, %18 : vector<2x1xf32>
    %20 = vector.broadcast %19 : vector<2x1xf32> to vector<2x128xf32>
    %21 = arith.divf %15, %20 : vector<2x128xf32>
    %cst_12 = arith.constant dense<0.000000e+00> : vector<2x128xf32>
    %22 = tpu.matmul %21, %3, %cst_12 {dimension_numbers = #tpu.dot_dimension_numbers<[1], [0], [0], [1], [0, 0, 1, 1], [], []>} : vector<2x128xf32>, vector<128x128xf32>, vector<2x128xf32> -> vector<2x128xf32>
    %23 = vector.broadcast %4 : vector<1x128xf32> to vector<2x128xf32>
    %24 = arith.addf %22, %23 : vector<2x128xf32>
    %25 = math.tanh %24 : vector<2x128xf32>
    %c0_13 = arith.constant 0 : index
    %c0_14 = arith.constant 0 : index
    %26 = vector.load %arg6[%c0_13, %c0_14] : memref<2x128xf32, #tpu.memory_space<vmem>>, vector<2x128xf32>
    tpu.vector_store %arg6[%c0_13, %c0_14], %25 {strides = array<i32>} : memref<2x128xf32, #tpu.memory_space<vmem>>, vector<2x128xf32>,
    return
  }
  func.func @transform_0(%arg0: i32) -> (i32, i32) {
    %c0_i32 = arith.constant 0 : i32
    %c0_i32_0 = arith.constant 0 : i32
    return %arg0, %c0_i32 : i32, i32
  }
  func.func @transform_1(%arg0: i32) -> (i32, i32) {
    %c0_i32 = arith.constant 0 : i32
    %c0_i32_0 = arith.constant 0 : i32
    return %arg0, %c0_i32 : i32, i32
  }
  func.func @transform_2(%arg0: i32) -> (i32, i32) {
    %c0_i32 = arith.constant 0 : i32
    %c0_i32_0 = arith.constant 0 : i32
    %c0_i32_1 = arith.constant 0 : i32
    return %c0_i32, %c0_i32_0 : i32, i32
  }
  func.func @transform_3(%arg0: i32) -> (i32, i32) {
    %c0_i32 = arith.constant 0 : i32
    %c0_i32_0 = arith.constant 0 : i32
    %c0_i32_1 = arith.constant 0 : i32
    return %c0_i32, %c0_i32_0 : i32, i32
  }
  func.func @transform_4(%arg0: i32) -> (i32, i32) {
    %c0_i32 = arith.constant 0 : i32
    %c0_i32_0 = arith.constant 0 : i32
    %c0_i32_1 = arith.constant 0 : i32
    return %c0_i32, %c0_i32_0 : i32, i32
  }
  func.func @transform_5(%arg0: i32) -> (i32, i32) {
    %c0_i32 = arith.constant 0 : i32
    %c0_i32_0 = arith.constant 0 : i32
    return %arg0, %c0_i32 : i32, i32
  }
}

</mosaic_0001>

<llo_original>
// kernel: tpu_custom_call.1
$region0: #{tpu_custom_call.1}
  #allocation0 [shape = 'u32[]', space=smem, size = 0x4, offset = 0x4, fixed_abs, tag = 'smem constant byte address 0x4 - core index']
  #allocation1 [shape = 'u32[144,128]{1,0:T(1,128)}', space=vmem, size = 0x12000, scoped, tag = 'internal scratch']
  %s0 = inlined_call_operand.hbm [shape: s32[2,8], index: 0, kind: input, shape index: {}]
  %s1 = inlined_call_operand.vmem [shape: f32[2,8], index: 1, kind: input, shape index: {}]
  %s2 = inlined_call_operand.hbm [shape: f32[64,128], index: 2, kind: input, shape index: {}]
  %s3 = inlined_call_operand.hbm [shape: f32[128,128], index: 3, kind: input, shape index: {}]
  %s4 = inlined_call_operand.vmem [shape: f32[1,128], index: 4, kind: input, shape index: {}]
  %s5 = inlined_call_operand.hbm [shape: f32[2,128], index: 5, kind: output, shape index: {}]
  %s6 = sld [smem:[#allocation0]]
  $region42: #{tpu_custom_call.1} parent=0
    _
  %s8 = ssub.s32 1, %s6
  %s9 = scalar_select 0, %s8, %s6
  $region1: #{tpu_custom_call.1} parent=0
    #allocation2 [shape = 'u8[1024]{0}', space=vmem, size = 0x400, scoped, tag = 'input window, operand 0, single buffered']
    #allocation3 [shape = 's32[1]{0}', space=sflag, size = 0x4, scoped, tag = 'scoped memory for tpu_custom_call.1']
    #allocation4 [shape = 's32[1]{0}', space=sflag, size = 0x4, scoped, tag = 'scoped memory for tpu_custom_call.1']
    #allocation5 [shape = 'u8[32768]{0}', space=vmem, size = 0x8000, scoped, tag = 'input window, operand 2, single buffered']
    #allocation6 [shape = 's32[1]{0}', space=sflag, size = 0x4, scoped, tag = 'scoped memory for tpu_custom_call.1']
    #allocation7 [shape = 'u8[65536]{0}', space=vmem, size = 0x10000, scoped, tag = 'input window, operand 3, single buffered']
    #allocation8 [shape = 'u8[1024]{0}', space=vmem, size = 0x400, scoped, tag = 'output window, operand 0, single buffered']
    %10 = vsyncpa [#allocation3], 0
    %11 = vsyncpa [#allocation6], 0
    %12 = vsyncpa [#allocation4], 0
    // Predicated region
    $region2: #{tpu_custom_call.1} parent=1 // pred_check
      _
    $region3: #{tpu_custom_call.1} parent=1 // pred_check_branch
      %14 = sbr.rel (0) target = $region5
    $region4: #{tpu_custom_call.1} parent=1 // pred_region
      %s16 = ssub.s32 32, 32
      %17 = vsyncadd [#allocation3], %s16
      %s19 = sshll.u32 [#allocation2], 4
      %s20 = int_to_ptr.vmem [resolvable:$true] %s19
      %22 = dma.hbm_to_vmem [thread:$0]  %s0, 32, %s20, [#allocation3]
    $region5: #{tpu_custom_call.1} parent=1 // pred_fallthru
      _
    // Predicated region
    $region6: #{tpu_custom_call.1} parent=1 // pred_check
      _
    $region7: #{tpu_custom_call.1} parent=1 // pred_check_branch
      %24 = sbr.rel (0) target = $region9
    $region8: #{tpu_custom_call.1} parent=1 // pred_region
      _
    $region9: #{tpu_custom_call.1} parent=1 // pred_fallthru
      _
    // Predicated region
    $region10: #{tpu_custom_call.1} parent=1 // pred_check
      _
    $region11: #{tpu_custom_call.1} parent=1 // pred_check_branch
      %26 = sbr.rel (0) target = $region13
    $region12: #{tpu_custom_call.1} parent=1 // pred_region
      %s28 = ssub.s32 1024, 1024
      %29 = vsyncadd [#allocation6], %s28
      %s30 = sshll.u32 [#allocation5], 4
      %s31 = int_to_ptr.vmem [resolvable:$true] %s30
      %36 = dma.hbm_to_vmem [thread:$0]  %s2, 1024, %s31, [#allocation6], 128, 128, 8
    $region13: #{tpu_custom_call.1} parent=1 // pred_fallthru
      _
    // Predicated region
    $region14: #{tpu_custom_call.1} parent=1 // pred_check
      _
    $region15: #{tpu_custom_call.1} parent=1 // pred_check_branch
      %38 = sbr.rel (0) target = $region17
    $region16: #{tpu_custom_call.1} parent=1 // pred_region
      %s40 = ssub.s32 2048, 2048
      %41 = vsyncadd [#allocation6], %s40
      %s42 = sshll.u32 [#allocation7], 4
      %s43 = int_to_ptr.vmem [resolvable:$true] %s42
      %48 = dma.hbm_to_vmem [thread:$0]  %s3, 2048, %s43, [#allocation6], 128, 128, 8
    $region17: #{tpu_custom_call.1} parent=1 // pred_fallthru
      _
    // Predicated region
    $region18: #{tpu_custom_call.1} parent=1 // pred_check
      _
    $region19: #{tpu_custom_call.1} parent=1 // pred_check_branch
      %50 = sbr.rel (0) target = $region21
    $region20: #{tpu_custom_call.1} parent=1 // pred_region
      _
    $region21: #{tpu_custom_call.1} parent=1 // pred_fallthru
      _
    // Predicated region
    $region22: #{tpu_custom_call.1} parent=1 // pred_check
      _
    $region23: #{tpu_custom_call.1} parent=1 // pred_check_branch
      %52 = sbr.rel (0) target = $region25
    $region24: #{tpu_custom_call.1} parent=1 // pred_region
      %53 = dma.done [#allocation3], 32
    $region25: #{tpu_custom_call.1} parent=1 // pred_fallthru
      _
    // Predicated region
    $region26: #{tpu_custom_call.1} parent=1 // pred_check
      _
    $region27: #{tpu_custom_call.1} parent=1 // pred_check_branch
      %55 = sbr.rel (0) target = $region29
    $region28: #{tpu_custom_call.1} parent=1 // pred_region
      %56 = dma.done [#allocation6], 1024
    $region29: #{tpu_custom_call.1} parent=1 // pred_fallthru
      _
    // Predicated region
    $region30: #{tpu_custom_call.1} parent=1 // pred_check
      _
    $region31: #{tpu_custom_call.1} parent=1 // pred_check_branch
      %58 = sbr.rel (0) target = $region33
    $region32: #{tpu_custom_call.1} parent=1 // pred_region
      %59 = dma.done [#allocation6], 2048
    $region33: #{tpu_custom_call.1} parent=1 // pred_fallthru
      _
    %v60 = vld [vmem:[#allocation2] sm:$0x3]
    %v61 = vld [vmem:[%s1] sm:$0x3]
    %v62 = vld [vmem:[#allocation5] sm:$0xff]
    %v63 = vld [vmem:[#allocation5 + $0x8] sm:$0xff]
    %v64 = vld [vmem:[#allocation5 + $0x10] sm:$0xff]
    %v65 = vld [vmem:[#allocation5 + $0x18] sm:$0xff]
    %v66 = vld [vmem:[#allocation5 + $0x20] sm:$0xff]
    %v67 = vld [vmem:[#allocation5 + $0x28] sm:$0xff]
    %v68 = vld [vmem:[#allocation5 + $0x30] sm:$0xff]
    %v69 = vld [vmem:[#allocation5 + $0x38] sm:$0xff]
    %v70 = vld [vmem:[#allocation7] sm:$0xff]
    %v71 = vld [vmem:[#allocation7 + $0x8] sm:$0xff]
    %v72 = vld [vmem:[#allocation7 + $0x10] sm:$0xff]
    %v73 = vld [vmem:[#allocation7 + $0x18] sm:$0xff]
    %v74 = vld [vmem:[#allocation7 + $0x20] sm:$0xff]
    %v75 = vld [vmem:[#allocation7 + $0x28] sm:$0xff]
    %v76 = vld [vmem:[#allocation7 + $0x30] sm:$0xff]
    %v77 = vld [vmem:[#allocation7 + $0x38] sm:$0xff]
    %v78 = vld [vmem:[#allocation7 + $0x40] sm:$0xff]
    %v79 = vld [vmem:[#allocation7 + $0x48] sm:$0xff]
    %v80 = vld [vmem:[#allocation7 + $0x50] sm:$0xff]
    %v81 = vld [vmem:[#allocation7 + $0x58] sm:$0xff]
    %v82 = vld [vmem:[#allocation7 + $0x60] sm:$0xff]
    %v83 = vld [vmem:[#allocation7 + $0x68] sm:$0xff]
    %v84 = vld [vmem:[#allocation7 + $0x70] sm:$0xff]
    %v85 = vld [vmem:[#allocation7 + $0x78] sm:$0xff]
    %v86 = vld [vmem:[%s4] sm:$0x1]
    %v87 = vlaneseq
    %v88 = vand.u32 %v87, 127
    %v89 = vlaneseq
    %v90 = vshrl.u32 %v89, 7
    %v91 = vsub.s32 0, %v90
    %v92 = vrot.slane %v60, %v91
    %94 = vbcast.lane.b32.xlu0 %v92, 256
    %v95 = vpop.permute.xlu0 %94
    %v96 = vlaneseq
    %v97 = vshrl.u32 %v96, 7
    %v98 = vsub.s32 1, %v97
    %v99 = vrot.slane %v60, %v98
    %101 = vbcast.lane.b32.xlu0 %v99, 256
    %v102 = vpop.permute.xlu0 %101
    %vm103 = vcmp.eq.s32.totalorder %v95, %v88
    %vm104 = vcmp.eq.s32.totalorder %v102, %v88
    %v105 = vsel %vm103, 1, 0
    %v106 = vsel %vm104, 1, 0
    %v107 = vcvt.s32.f32 %v105
    %v108 = vcvt.s32.f32 %v106
    %v109 = vlaneseq
    %v110 = vshrl.u32 %v109, 7
    %v111 = vsub.s32 0, %v110
    %v112 = vrot.slane %v61, %v111
    %114 = vbcast.lane.b32.xlu0 %v112, 256
    %v115 = vpop.permute.xlu0 %114
    %v116 = vlaneseq
    %v117 = vshrl.u32 %v116, 7
    %v118 = vsub.s32 1, %v117
    %v119 = vrot.slane %v61, %v118
    %121 = vbcast.lane.b32.xlu0 %v119, 256
    %v122 = vpop.permute.xlu0 %121
    %v123 = vmul.f32 %v107, %v115
    %v124 = vmul.f32 %v108, %v122
    %vm125 = vcmask 523264
    %v126 = vsel %vm125, %v123, 0.0
    %v127 = vrot.slane %v126, 4
    %v128 = vadd.f32 %v126, %v127
    %v129 = vrot.slane %v128, 2
    %v130 = vadd.f32 %v128, %v129
    %v131 = vrot.slane %v130, 1
    %v132 = vadd.f32 %v130, %v131
    %v133 = vsel %vm125, %v124, 0.0
    %v134 = vrot.slane %v133, 4
    %v135 = vadd.f32 %v133, %v134
    %v136 = vrot.slane %v135, 2
    %v137 = vadd.f32 %v135, %v136
    %v138 = vrot.slane %v137, 1
    %v139 = vadd.f32 %v137, %v138
    %vm142 = vcmask 1041409
    %v143 = vsel %vm142, %v139, %v132
    %v144 = vsel %vm125, %v143, 0
    %146 = vmatprep.subr.mxu0 0.0
    %147 = vmatpush1.msra.mxu0 %v62
    %148 = vmatprep.subr.mxu0 0.0
    %149 = vmatpush1.msra.mxu0 %v63
    %150 = vmatprep.subr.mxu0 0.0
    %151 = vmatpush1.msra.mxu0 %v64
    %152 = vmatprep.subr.mxu0 0.0
    %153 = vmatpush1.msra.mxu0 %v65
    %154 = vmatprep.subr.mxu0 0.0
    %155 = vmatpush1.msra.mxu0 %v66
    %156 = vmatprep.subr.mxu0 0.0
    %157 = vmatpush1.msra.mxu0 %v67
    %158 = vmatprep.subr.mxu0 0.0
    %159 = vmatpush1.msra.mxu0 %v68
    %160 = vmatprep.subr.mxu0 0.0
    %161 = vmatpush1.msra.mxu0 %v69
    %162 = vmatprep.subr.mxu0 0.0
    %163 = vmatpush1.msra.mxu0 0.0
    %164 = vmatprep.subr.mxu0 0.0
    %165 = vmatpush1.msra.mxu0 0.0
    %166 = vmatprep.subr.mxu0 0.0
    %167 = vmatpush1.msra.mxu0 0.0
    %168 = vmatprep.subr.mxu0 0.0
    %169 = vmatpush1.msra.mxu0 0.0
    %170 = vmatprep.subr.mxu0 0.0
    %171 = vmatpush1.msra.mxu0 0.0
    %172 = vmatprep.subr.mxu0 0.0
    %173 = vmatpush1.msra.mxu0 0.0
    %174 = vmatprep.subr.mxu0 0.0
    %175 = vmatpush1.msra.mxu0 0.0
    %176 = vmatprep.subr.mxu0 0.0
    %177 = vmatpush1.msra.mxu0 0.0
    %178 = vmatprep.subr.mxu0 0.0
    %179 = vmatpush1.msra.mxu0 0.0
    %180 = vmatprep.subr.mxu0 0.0
    %181 = vmatpush1.msra.mxu0 0.0
    %182 = vmatprep.subr.mxu0 0.0
    %183 = vmatpush1.msra.mxu0 0.0
    %184 = vmatprep.subr.mxu0 0.0
    %185 = vmatpush1.msra.mxu0 0.0
    %186 = vmatprep.subr.mxu0 0.0
    %187 = vmatpush1.msra.mxu0 0.0
    %188 = vmatprep.subr.mxu0 0.0
    %189 = vmatpush1.msra.mxu0 0.0
    %190 = vmatprep.subr.mxu0 0.0
    %191 = vmatpush1.msra.mxu0 0.0
    %192 = vmatprep.subr.mxu0 0.0
    %193 = vmatpush1.msra.mxu0 0.0
    %194 = vmatprep.subr.mxu0 0.0
    %195 = vmatpush1.msra.mxu0 0.0
    %196 = vmatprep.subr.mxu0 0.0
    %197 = vmatpush1.msra.mxu0 0.0
    %198 = vmatprep.subr.mxu0 0.0
    %199 = vmatpush1.msra.mxu0 0.0
    %200 = vmatprep.subr.mxu0 0.0
    %201 = vmatpush1.msra.mxu0 0.0
    %202 = vmatprep.subr.mxu0 0.0
    %203 = vmatpush1.msra.mxu0 0.0
    %204 = vmatprep.subr.mxu0 0.0
    %205 = vmatpush1.msra.mxu0 0.0
    %206 = vmatprep.subr.mxu0 0.0
    %207 = vmatpush1.msra.mxu0 0.0
    %208 = vmatprep.subr.mxu0 0.0
    %209 = vmatpush1.msra.mxu0 0.0
    %210 = vmatprep.mubr.f32.mxu0 0.0
    %211 = vmatmul.mubr.f32.gmra.mrb[0].mxu0 %v144
    %v212 = vpop.f32.mrb[0].mxu0
    %v213 = vadd.f32 0.0, %v212
    %v214 = vpop.f32.mrb[0].mxu0
    %215 = vdwg.mxu0
    %vm216 = vcmask 58368
    %v217 = vsel %vm216, %v61, 0.0
    %218 = vadd.xlane.f32.xlu0 %v217
    %v219 = vpop.xlane.xlu0 %218
    %v220 = vmax.f32 %v219, 1.0
    %v221 = vrcp.pop %v220
    %v222 = vmul.f32 %v213, %v221
    %v224 = vlaneseq
    %v225 = vshrl.u32 %v224, 7
    %v226 = vsub.s32 0, %v225
    %v227 = vrot.slane %v86, %v226
    %229 = vmatprep.subr.mxu0 0.0
    %230 = vmatpush1.msra.mxu0 %v70
    %231 = vmatprep.subr.mxu0 0.0
    %232 = vmatpush1.msra.mxu0 %v71
    %233 = vmatprep.subr.mxu0 0.0
    %234 = vmatpush1.msra.mxu0 %v72
    %235 = vmatprep.subr.mxu0 0.0
    %236 = vmatpush1.msra.mxu0 %v73
    %237 = vmatprep.subr.mxu0 0.0
    %238 = vmatpush1.msra.mxu0 %v74
    %239 = vmatprep.subr.mxu0 0.0
    %240 = vmatpush1.msra.mxu0 %v75
    %241 = vmatprep.subr.mxu0 0.0
    %242 = vmatpush1.msra.mxu0 %v76
    %243 = vmatprep.subr.mxu0 0.0
    %244 = vmatpush1.msra.mxu0 %v77
    %245 = vmatprep.subr.mxu0 0.0
    %246 = vmatpush1.msra.mxu0 %v78
    %247 = vmatprep.subr.mxu0 0.0
    %248 = vmatpush1.msra.mxu0 %v79
    %249 = vmatprep.subr.mxu0 0.0
    %250 = vmatpush1.msra.mxu0 %v80
    %251 = vmatprep.subr.mxu0 0.0
    %252 = vmatpush1.msra.mxu0 %v81
    %253 = vmatprep.subr.mxu0 0.0
    %254 = vmatpush1.msra.mxu0 %v82
    %255 = vmatprep.subr.mxu0 0.0
    %256 = vmatpush1.msra.mxu0 %v83
    %257 = vmatprep.subr.mxu0 0.0
    %258 = vmatpush1.msra.mxu0 %v84
    %259 = vmatprep.subr.mxu0 0.0
    %260 = vmatpush1.msra.mxu0 %v85
    %261 = vmatprep.subr.mxu0 0.0
    %262 = vmatpush1.msra.mxu0 0.0
    %263 = vmatprep.subr.mxu0 0.0
    %264 = vmatpush1.msra.mxu0 0.0
    %265 = vmatprep.subr.mxu0 0.0
    %266 = vmatpush1.msra.mxu0 0.0
    %267 = vmatprep.subr.mxu0 0.0
    %268 = vmatpush1.msra.mxu0 0.0
    %269 = vmatprep.subr.mxu0 0.0
    %270 = vmatpush1.msra.mxu0 0.0
    %271 = vmatprep.subr.mxu0 0.0
    %272 = vmatpush1.msra.mxu0 0.0
    %273 = vmatprep.subr.mxu0 0.0
    %274 = vmatpush1.msra.mxu0 0.0
    %275 = vmatprep.subr.mxu0 0.0
    %276 = vmatpush1.msra.mxu0 0.0
    %277 = vmatprep.subr.mxu0 0.0
    %278 = vmatpush1.msra.mxu0 0.0
    %279 = vmatprep.subr.mxu0 0.0
    %280 = vmatpush1.msra.mxu0 0.0
    %281 = vmatprep.subr.mxu0 0.0
    %282 = vmatpush1.msra.mxu0 0.0
    %283 = vmatprep.subr.mxu0 0.0
    %284 = vmatpush1.msra.mxu0 0.0
    %285 = vmatprep.subr.mxu0 0.0
    %286 = vmatpush1.msra.mxu0 0.0
    %287 = vmatprep.subr.mxu0 0.0
    %288 = vmatpush1.msra.mxu0 0.0
    %289 = vmatprep.subr.mxu0 0.0
    %290 = vmatpush1.msra.mxu0 0.0
    %291 = vmatprep.subr.mxu0 0.0
    %292 = vmatpush1.msra.mxu0 0.0
    %293 = vmatprep.mubr.f32.mxu0 0.0
    %294 = vmatmul.mubr.f32.gmra.mrb[0].mxu0 %v222
    %v295 = vpop.f32.mrb[0].mxu0
    %v296 = vadd.f32 %v227, %v295
    %v297 = vpop.f32.mrb[0].mxu0
    %298 = vdwg.mxu0
    %v299 = vtanh.pop %v296
    %300 = vst [vmem:[#allocation8] sm:$0x3] %v299
    // Predicated region
    $region34: #{tpu_custom_call.1} parent=1 // pred_check
      _
    $region35: #{tpu_custom_call.1} parent=1 // pred_check_branch
      %302 = sbr.rel (0) target = $region37
    $region36: #{tpu_custom_call.1} parent=1 // pred_region
      %s304 = ssub.s32 32, 32
      %305 = vsyncadd [#allocation4], %s304
      %s307 = sshll.u32 [#allocation8], 4
      %s308 = int_to_ptr.vmem [resolvable:$true] %s307
      %310 = dma.vmem_to_hbm [thread:$0]  %s308, 32, %s5, [#allocation4]
    $region37: #{tpu_custom_call.1} parent=1 // pred_fallthru
      _
    // Predicated region
    $region38: #{tpu_custom_call.1} parent=1 // pred_check
      _
    $region39: #{tpu_custom_call.1} parent=1 // pred_check_branch
      %312 = sbr.rel (0) target = $region41
    $region40: #{tpu_custom_call.1} parent=1 // pred_region
      %313 = dma.done [#allocation4], 32
    $region41: #{tpu_custom_call.1} parent=1 // pred_fallthru
      _
    %314 = vsyncpa [#allocation3], 1
    %315 = vsyncpa [#allocation6], 1
    %316 = vsyncpa [#allocation4], 1

</llo_original>
